<compile_context>
chip_gen: v6e
topology: v6e:2x2x1
jax: 0.10.0
libtpu: 0.0.40
codegen_flags: <defaults>
</compile_context>

<pallas_src>
import functools

import jax
import jax.numpy as jnp
from jax import lax
from jax.experimental import pallas as pl
from jax.experimental.pallas import tpu as pltpu

EPS = 1e-8          # normalize_2nd_moment epsilon (StyleGAN2 convention)
LANE = 128
SUBLANE = 8


def _cdiv(a, b):
    return (a + b - 1) // b


def _round_up(x, m):
    return _cdiv(x, m) * m


def _chip_topology():
    """(num_tensorcores_per_chip, vmem_capacity_bytes) with conservative fallbacks."""
    cores, vmem = 0, 0
    try:
        info = pltpu.get_tpu_info()
        for name in ("num_cores", "core_count", "tensorcore_count", "num_tensorcores"):
            v = getattr(info, name, None)
            if isinstance(v, int) and v > 0:
                cores = v
                break
        v = getattr(info, "vmem_capacity_bytes", None)
        if isinstance(v, int) and v > 0:
            vmem = v
    except Exception:
        pass
    kind = ""
    try:
        kind = jax.devices()[0].device_kind.lower()
    except Exception:
        pass
    if cores <= 0:
        # v7x has 2 TCs/chip (v4/v5p megacore also exposes 2); v5e/v6e are single-TC.
        cores = 2 if ("7" in kind or "v4" in kind or "v5p" in kind) else 1
    if vmem <= 0:
        vmem = (64 << 20) if "7" in kind else (128 << 20)
    return cores, vmem


def _pick_batch_tile(bs, num_cores):
    """Single-TC (v5e/v6e): one grid step when the batch fits (<=1024 rows), else
    ~512-row tiles (per-step overhead ~0.35us; 512-row tiles hit ~85% of roofline).
    Multi-TC (v7x): grid step count is a multiple of the core count so the
    'parallel' batch axis shards evenly across both TensorCores."""
    bs = max(int(bs), 1)
    if num_cores <= 1:
        if bs <= 1024:
            return _round_up(bs, SUBLANE)
        n_steps = _cdiv(bs, 512)
    else:
        n_steps = num_cores * max(1, _cdiv(bs, num_cores * 512))
    return _round_up(_cdiv(bs, n_steps), SUBLANE)


def _resident_spec(shape):
    """Whole-array resident (grid-invariant) operand; single-buffered since its
    block never changes across the batch grid."""
    index_map = functools.partial(lambda i, nd: (0,) * nd, nd=len(shape))
    try:
        return pl.BlockSpec(shape, index_map, pipeline_mode=pl.Buffered(1))
    except Exception:  # older API without pipeline_mode — fall back to default buffering
        return pl.BlockSpec(shape, index_map)


def _generator_kernel(num_hidden, inv_inp_dim, *refs):
    """refs = (z, w0, b0, w1, b1, ..., w_out, b_out, out).

    z/out are f32 (batch_tile, true feature width); weights are bf16; biases f32."""
    z_ref = refs[0]
    out_ref = refs[-1]
    p = refs[1:-1]

    z = z_ref[...].astype(jnp.float32)
    # normalize_2nd_moment: x * rsqrt(mean(x^2, dim=1) + eps).  z carries no padded
    # lanes, so sum/inp_dim is the exact mean.
    mean_sq = jnp.sum(z * z, axis=-1, keepdims=True) * inv_inp_dim
    y = z * lax.rsqrt(mean_sq + EPS)

    idx = 0
    for _ in range(num_hidden):
        w = p[idx][...]        # bf16 (in, hidden_pad)
        b = p[idx + 1][...]    # f32  (1, hidden_pad)
        idx += 2
        y = jnp.dot(y.astype(jnp.bfloat16), w,
                    preferred_element_type=jnp.float32) + b
        y = jnp.maximum(y, 0.0)  # ReLU (f32 elementwise — fast path on every chip)

    # Output layer (no activation; output_bn=False).  True out_dim store.
    w = p[idx][...]
    b = p[idx + 1][...]
    out_ref[...] = jnp.dot(y.astype(jnp.bfloat16), w,
                           preferred_element_type=jnp.float32) + b


def generator_forward(z, params, *, batch_tile=None):
    """z: (bs, inp_dim).  params: [w0,b0, ..., w_out,b_out] float32, with w_i of shape
    (in_i, out_i) (PyTorch Linear weight pre-transposed) and b_i of shape (1, out_i)
    or (out_i,).  Returns (bs, out_dim) float32."""
    bs, inp_dim = z.shape
    num_hidden = (len(params) - 2) // 2
    out_dim = params[-1].shape[-1]

    num_cores, vmem_cap = _chip_topology()
    if batch_tile is None:
        batch_tile = _pick_batch_tile(bs, num_cores)
    bs_pad = _round_up(bs, batch_tile)

    # Pad only the batch (rows of zeros are inert: rsqrt(0 + eps) * 0 == 0).
    z_p = z.astype(jnp.float32)
    if bs_pad != bs:
        z_p = jnp.pad(z_p, ((0, bs_pad - bs), (0, 0)))

    # Hidden widths padded to 128 lanes (zero weight rows/cols + zero bias keep padded
    # lanes at 0 through ReLU).  First layer keeps K == true inp_dim; output layer
    # keeps its true out_dim (no padded writeback).  Weights cast to bf16.
    padded_params = []
    layer_io = []
    curr = inp_dim
    for li in range(num_hidden + 1):
        w = params[2 * li]
        b = params[2 * li + 1]
        fin, fout = w.shape
        fout_p = _round_up(fout, LANE) if li < num_hidden else fout
        w_p = jnp.zeros((curr, fout_p), jnp.bfloat16)
        w_p = w_p.at[:fin, :fout].set(w.astype(jnp.bfloat16))
        b_p = jnp.zeros((1, fout_p), jnp.float32)
        b_p = b_p.at[:, :fout].set(b.astype(jnp.float32).reshape(1, fout))
        padded_params += [w_p, b_p]
        layer_io.append((curr, fout_p))
        curr = fout_p

    # Block specs: tile the batch only; params are whole-array resident (Buffered(1)).
    in_specs = [pl.BlockSpec((batch_tile, inp_dim), lambda i: (i, 0))]
    for prm in padded_params:
        in_specs.append(_resident_spec(prm.shape))
    out_specs = pl.BlockSpec((batch_tile, out_dim), lambda i: (i, 0))

    # Advisory cost estimate for XLA scheduling.
    flops = 2 * bs_pad * sum(fi * fo for fi, fo in layer_io)
    param_bytes = sum(int(p.size) * p.dtype.itemsize for p in padded_params)
    bytes_accessed = bs_pad * inp_dim * 4 + param_bytes + bs_pad * out_dim * 4
    cost = pl.CostEstimate(flops=int(flops), transcendentals=int(bs_pad),
                           bytes_accessed=int(bytes_accessed))

    # VMEM budget: double-buffered z/out tiles + single-buffered params + live
    # intermediate activations, with a small margin; capped below physical VMEM
    # (headroom for compiler-internal scratch on v7x's 64 MiB parts).
    max_feat = max(fo for _, fo in layer_io)
    io_tile_bytes = 2 * batch_tile * (inp_dim + out_dim) * 4
    work_bytes = 3 * batch_tile * max_feat * 4
    vmem_needed = io_tile_bytes + param_bytes + work_bytes + (2 << 20)
    vmem_limit = int(min(int(0.85 * vmem_cap), max(vmem_needed, 32 << 20)))

    kernel = functools.partial(_generator_kernel, num_hidden, 1.0 / float(inp_dim))

    out_p = pl.pallas_call(
        kernel,
        out_shape=jax.ShapeDtypeStruct((bs_pad, out_dim), jnp.float32),
        grid_spec=pltpu.PrefetchScalarGridSpec(
            num_scalar_prefetch=0,
            grid=(bs_pad // batch_tile,),
            in_specs=in_specs,
            out_specs=out_specs,
        ),
        compiler_params=pltpu.CompilerParams(
            dimension_semantics=("parallel",),
            vmem_limit_bytes=vmem_limit,
        ),
        cost_estimate=cost,
    )(z_p, *padded_params)

    return out_p[:bs] if bs_pad != bs else out_p


def init_params(key, inp_dim, dims, out_dim):
    """Deterministic PyTorch-Linear-style init: U(-1/sqrt(fan_in), 1/sqrt(fan_in)).
    Weights stored as (in, out); biases as (1, out)."""
    params = []
    curr = inp_dim
    for hid in list(dims) + [out_dim]:
        key, kw, kb = jax.random.split(key, 3)
        bound = 1.0 / jnp.sqrt(curr)
        w = jax.random.uniform(kw, (curr, hid), jnp.float32, -bound, bound)
        b = jax.random.uniform(kb, (1, hid), jnp.float32, -bound, bound)
        params += [w, b]
        curr = hid
    return params


def reference_forward(z, params, *, cast_bf16=False):
    """Plain-JAX reference.  cast_bf16=True mirrors the kernel's bf16 MXU operands
    (f32 accumulation); cast_bf16=False is the exact f32 math of the PyTorch module."""
    y = z.astype(jnp.float32)
    y = y * lax.rsqrt(jnp.mean(y * y, axis=-1, keepdims=True) + EPS)
    num_hidden = (len(params) - 2) // 2
    idx = 0
    for _ in range(num_hidden):
        lhs = y.astype(jnp.bfloat16) if cast_bf16 else y
        rhs = params[idx].astype(jnp.bfloat16) if cast_bf16 else params[idx]
        y = jnp.dot(lhs, rhs, preferred_element_type=jnp.float32) + params[idx + 1]
        y = jnp.maximum(y, 0.0)
        idx += 2
    lhs = y.astype(jnp.bfloat16) if cast_bf16 else y
    rhs = params[idx].astype(jnp.bfloat16) if cast_bf16 else params[idx]
    return jnp.dot(lhs, rhs, preferred_element_type=jnp.float32) + params[idx + 1]


if __name__ == "__main__":
    # Config consistent with the module: inp_dim=32, dims=[64, 64], out_dim=16.
    INP_DIM, DIMS, OUT_DIM = 32, (64, 64), 16
    BS = 256

    key = jax.random.PRNGKey(0)
    kz, kp = jax.random.split(key)
    # prior_type='gaussian', gaussian_scale=1.0 (get_prior equivalent, host-side RNG)
    z = jax.random.normal(kz, (BS, INP_DIM), dtype=jnp.float32)
    params = init_params(kp, INP_DIM, DIMS, OUT_DIM)

    out = generator_forward(z, params)
    out = jax.block_until_ready(out)
    assert out.shape == (BS, OUT_DIM)

    # Tight check against a bf16-matmul / f32-accumulate reference (same arithmetic).
    ref_bf16 = reference_forward(z, params, cast_bf16=True)
    assert jnp.allclose(out, ref_bf16, atol=5e-3, rtol=5e-3), "mismatch vs bf16 reference"

    # Loose check against the exact f32 reference (bf16 operand rounding only).
    ref_f32 = reference_forward(z, params, cast_bf16=False)
    assert jnp.allclose(out, ref_f32, atol=5e-2, rtol=5e-2), "mismatch vs f32 reference"

    # TODO(synk): BatchNorm1d branches (use_bn / output_bn) are config-off by default
    # in the module and are not emitted in the kernel.
    print("KERNEL_OK")
</pallas_src>

<mosaic_0001>
module attributes {stable_mosaic.version = 11 : i64} {
  func.func @_generator_kernel(%arg0: i32, %arg1: memref<256x32xf32, #tpu.memory_space<vmem>>, %arg2: memref<32x128xbf16, #tpu.memory_space<vmem>>, %arg3: memref<1x128xf32, #tpu.memory_space<vmem>>, %arg4: memref<128x128xbf16, #tpu.memory_space<vmem>>, %arg5: memref<1x128xf32, #tpu.memory_space<vmem>>, %arg6: memref<128x16xbf16, #tpu.memory_space<vmem>>, %arg7: memref<1x16xf32, #tpu.memory_space<vmem>>, %arg8: memref<256x16xf32, #tpu.memory_space<vmem>>) attributes {dimension_semantics = [#tpu.dimension_semantics<parallel>], iteration_bounds = array<i64: 1>, scalar_prefetch = 0 : i64, scratch_operands = 0 : i64, tpu.core_type = #tpu.core_type<tc>, window_params = [{transform_indices = @transform_0, window_bounds = array<i64: 256, 32>}, {pipeline_mode = #tpu.pipeline_mode<synchronous>, transform_indices = @transform_1, window_bounds = array<i64: 32, 128>}, {pipeline_mode = #tpu.pipeline_mode<synchronous>, transform_indices = @transform_2, window_bounds = array<i64: 1, 128>}, {pipeline_mode = #tpu.pipeline_mode<synchronous>, transform_indices = @transform_3, window_bounds = array<i64: 128, 128>}, {pipeline_mode = #tpu.pipeline_mode<synchronous>, transform_indices = @transform_4, window_bounds = array<i64: 1, 128>}, {pipeline_mode = #tpu.pipeline_mode<synchronous>, transform_indices = @transform_5, window_bounds = array<i64: 128, 16>}, {pipeline_mode = #tpu.pipeline_mode<synchronous>, transform_indices = @transform_6, window_bounds = array<i64: 1, 16>}, {transform_indices = @transform_7, window_bounds = array<i64: 256, 16>}]} {
    %c0 = arith.constant 0 : index
    %c0_0 = arith.constant 0 : index
    %0 = vector.load %arg1[%c0, %c0_0] : memref<256x32xf32, #tpu.memory_space<vmem>>, vector<256x32xf32>
    %1 = arith.mulf %0, %0 : vector<256x32xf32>
    %cst = arith.constant dense<0.000000e+00> : vector<256xf32>
    %2 = vector.multi_reduction <add>, %1, %cst [1] : vector<256x32xf32> to vector<256xf32>
    %3 = vector.shape_cast %2 : vector<256xf32> to vector<256x1xf32>
    %cst_1 = arith.constant 3.125000e-02 : f32
    %4 = vector.broadcast %cst_1 : f32 to vector<256x1xf32>
    %5 = arith.mulf %3, %4 : vector<256x1xf32>
    %cst_2 = arith.constant 9.99999993E-9 : f32
    %6 = vector.broadcast %cst_2 : f32 to vector<256x1xf32>
    %7 = arith.addf %5, %6 : vector<256x1xf32>
    %8 = math.rsqrt %7 : vector<256x1xf32>
    %9 = vector.broadcast %8 : vector<256x1xf32> to vector<256x32xf32>
    %10 = arith.mulf %0, %9 : vector<256x32xf32>
    %c0_3 = arith.constant 0 : index
    %c0_4 = arith.constant 0 : index
    %11 = vector.load %arg2[%c0_3, %c0_4] : memref<32x128xbf16, #tpu.memory_space<vmem>>, vector<32x128xbf16>
    %c0_5 = arith.constant 0 : index
    %c0_6 = arith.constant 0 : index
    %12 = vector.load %arg3[%c0_5, %c0_6] : memref<1x128xf32, #tpu.memory_space<vmem>>, vector<1x128xf32>
    %13 = arith.truncf %10 : vector<256x32xf32> to vector<256x32xbf16>
    %cst_7 = arith.constant dense<0.000000e+00> : vector<256x128xf32>
    %14 = tpu.matmul %13, %11, %cst_7 {dimension_numbers = #tpu.dot_dimension_numbers<[1], [0], [0], [1], [0, 0, 1, 1], [], []>} : vector<256x32xbf16>, vector<32x128xbf16>, vector<256x128xf32> -> vector<256x128xf32>
    %15 = vector.broadcast %12 : vector<1x128xf32> to vector<256x128xf32>
    %16 = arith.addf %14, %15 : vector<256x128xf32>
    %cst_8 = arith.constant 0.000000e+00 : f32
    %17 = vector.broadcast %cst_8 : f32 to vector<256x128xf32>
    %18 = arith.maximumf %16, %17 : vector<256x128xf32>
    %c0_9 = arith.constant 0 : index
    %c0_10 = arith.constant 0 : index
    %19 = vector.load %arg4[%c0_9, %c0_10] : memref<128x128xbf16, #tpu.memory_space<vmem>>, vector<128x128xbf16>
    %c0_11 = arith.constant 0 : index
    %c0_12 = arith.constant 0 : index
    %20 = vector.load %arg5[%c0_11, %c0_12] : memref<1x128xf32, #tpu.memory_space<vmem>>, vector<1x128xf32>
    %21 = arith.truncf %18 : vector<256x128xf32> to vector<256x128xbf16>
    %cst_13 = arith.constant dense<0.000000e+00> : vector<256x128xf32>
    %22 = tpu.matmul %21, %19, %cst_13 {dimension_numbers = #tpu.dot_dimension_numbers<[1], [0], [0], [1], [0, 0, 1, 1], [], []>} : vector<256x128xbf16>, vector<128x128xbf16>, vector<256x128xf32> -> vector<256x128xf32>
    %23 = vector.broadcast %20 : vector<1x128xf32> to vector<256x128xf32>
    %24 = arith.addf %22, %23 : vector<256x128xf32>
    %cst_14 = arith.constant 0.000000e+00 : f32
    %25 = vector.broadcast %cst_14 : f32 to vector<256x128xf32>
    %26 = arith.maximumf %24, %25 : vector<256x128xf32>
    %c0_15 = arith.constant 0 : index
    %c0_16 = arith.constant 0 : index
    %27 = vector.load %arg6[%c0_15, %c0_16] : memref<128x16xbf16, #tpu.memory_space<vmem>>, vector<128x16xbf16>
    %c0_17 = arith.constant 0 : index
    %c0_18 = arith.constant 0 : index
    %28 = vector.load %arg7[%c0_17, %c0_18] : memref<1x16xf32, #tpu.memory_space<vmem>>, vector<1x16xf32>
    %29 = arith.truncf %26 : vector<256x128xf32> to vector<256x128xbf16>
    %cst_19 = arith.constant dense<0.000000e+00> : vector<256x16xf32>
    %30 = tpu.matmul %29, %27, %cst_19 {dimension_numbers = #tpu.dot_dimension_numbers<[1], [0], [0], [1], [0, 0, 1, 1], [], []>} : vector<256x128xbf16>, vector<128x16xbf16>, vector<256x16xf32> -> vector<256x16xf32>
    %31 = vector.broadcast %28 : vector<1x16xf32> to vector<256x16xf32>
    %32 = arith.addf %30, %31 : vector<256x16xf32>
    %c0_20 = arith.constant 0 : index
    %c0_21 = arith.constant 0 : index
    %33 = vector.load %arg8[%c0_20, %c0_21] : memref<256x16xf32, #tpu.memory_space<vmem>>, vector<256x16xf32>
    tpu.vector_store %arg8[%c0_20, %c0_21], %32 {strides = array<i32>} : memref<256x16xf32, #tpu.memory_space<vmem>>, vector<256x16xf32>,
    return
  }
  func.func @transform_0(%arg0: i32) -> (i32, i32) {
    %c0_i32 = arith.constant 0 : i32
    %c0_i32_0 = arith.constant 0 : i32
    return %arg0, %c0_i32 : i32, i32
  }
  func.func @transform_1(%arg0: i32) -> (i32, i32) {
    %c0_i32 = arith.constant 0 : i32
    %c0_i32_0 = arith.constant 0 : i32
    %c0_i32_1 = arith.constant 0 : i32
    return %c0_i32, %c0_i32_0 : i32, i32
  }
  func.func @transform_2(%arg0: i32) -> (i32, i32) {
    %c0_i32 = arith.constant 0 : i32
    %c0_i32_0 = arith.constant 0 : i32
    %c0_i32_1 = arith.constant 0 : i32
    return %c0_i32, %c0_i32_0 : i32, i32
  }
  func.func @transform_3(%arg0: i32) -> (i32, i32) {
    %c0_i32 = arith.constant 0 : i32
    %c0_i32_0 = arith.constant 0 : i32
    %c0_i32_1 = arith.constant 0 : i32
    return %c0_i32, %c0_i32_0 : i32, i32
  }
  func.func @transform_4(%arg0: i32) -> (i32, i32) {
    %c0_i32 = arith.constant 0 : i32
    %c0_i32_0 = arith.constant 0 : i32
    %c0_i32_1 = arith.constant 0 : i32
    return %c0_i32, %c0_i32_0 : i32, i32
  }
  func.func @transform_5(%arg0: i32) -> (i32, i32) {
    %c0_i32 = arith.constant 0 : i32
    %c0_i32_0 = arith.constant 0 : i32
    %c0_i32_1 = arith.constant 0 : i32
    return %c0_i32, %c0_i32_0 : i32, i32
  }
  func.func @transform_6(%arg0: i32) -> (i32, i32) {
    %c0_i32 = arith.constant 0 : i32
    %c0_i32_0 = arith.constant 0 : i32
    %c0_i32_1 = arith.constant 0 : i32
    return %c0_i32, %c0_i32_0 : i32, i32
  }
  func.func @transform_7(%arg0: i32) -> (i32, i32) {
    %c0_i32 = arith.constant 0 : i32
    %c0_i32_0 = arith.constant 0 : i32
    return %arg0, %c0_i32 : i32, i32
  }
}

</mosaic_0001>

<llo_original>
// kernel: tpu_custom_call.1
$region0: #{tpu_custom_call.1}
  #allocation0 [shape = 'u32[]', space=smem, size = 0x4, offset = 0x4, fixed_abs, tag = 'smem constant byte address 0x4 - core index']
  #allocation1 [shape = 'u32[144,128]{1,0:T(1,128)}', space=vmem, size = 0x12000, scoped, tag = 'internal scratch']
  %s0 = inlined_call_operand.vmem [shape: f32[256,32], index: 0, kind: input, shape index: {}]
  %s1 = inlined_call_operand.vmem [shape: bf16[32,128], index: 1, kind: input, shape index: {}]
  %s2 = inlined_call_operand.vmem [shape: f32[1,128], index: 2, kind: input, shape index: {}]
  %s3 = inlined_call_operand.vmem [shape: bf16[128,128], index: 3, kind: input, shape index: {}]
  %s4 = inlined_call_operand.vmem [shape: f32[1,128], index: 4, kind: input, shape index: {}]
  %s5 = inlined_call_operand.vmem [shape: bf16[128,16], index: 5, kind: input, shape index: {}]
  %s6 = inlined_call_operand.vmem [shape: f32[1,16], index: 6, kind: input, shape index: {}]
  %s7 = inlined_call_operand.vmem [shape: f32[256,16], index: 7, kind: output, shape index: {}]
  %s8 = sld [smem:[#allocation0]]
  $region38: #{tpu_custom_call.1} parent=0
    _
  %s10 = ssub.s32 1, %s8
  %s11 = scalar_select 0, %s10, %s8
  // Predicated region
  $region2: #{tpu_custom_call.1} parent=0 // pred_check
    _
  $region3: #{tpu_custom_call.1} parent=0 // pred_check_branch
    %13 = sbr.rel (0) target = $region5
  $region4: #{tpu_custom_call.1} parent=0 // pred_region
    _
  $region5: #{tpu_custom_call.1} parent=0 // pred_fallthru
    _
  // Predicated region
  $region6: #{tpu_custom_call.1} parent=0 // pred_check
    _
  $region7: #{tpu_custom_call.1} parent=0 // pred_check_branch
    %15 = sbr.rel (0) target = $region9
  $region8: #{tpu_custom_call.1} parent=0 // pred_region
    _
  $region9: #{tpu_custom_call.1} parent=0 // pred_fallthru
    _
  // Predicated region
  $region10: #{tpu_custom_call.1} parent=0 // pred_check
    _
  $region11: #{tpu_custom_call.1} parent=0 // pred_check_branch
    %17 = sbr.rel (0) target = $region13
  $region12: #{tpu_custom_call.1} parent=0 // pred_region
    _
  $region13: #{tpu_custom_call.1} parent=0 // pred_fallthru
    _
  // Predicated region
  $region14: #{tpu_custom_call.1} parent=0 // pred_check
    _
  $region15: #{tpu_custom_call.1} parent=0 // pred_check_branch
    %19 = sbr.rel (0) target = $region17
  $region16: #{tpu_custom_call.1} parent=0 // pred_region
    _
  $region17: #{tpu_custom_call.1} parent=0 // pred_fallthru
    _
  // Predicated region
  $region18: #{tpu_custom_call.1} parent=0 // pred_check
    _
  $region19: #{tpu_custom_call.1} parent=0 // pred_check_branch
    %21 = sbr.rel (0) target = $region21
  $region20: #{tpu_custom_call.1} parent=0 // pred_region
    _
  $region21: #{tpu_custom_call.1} parent=0 // pred_fallthru
    _
  // Predicated region
  $region22: #{tpu_custom_call.1} parent=0 // pred_check
    _
  $region23: #{tpu_custom_call.1} parent=0 // pred_check_branch
    %23 = sbr.rel (0) target = $region25
  $region24: #{tpu_custom_call.1} parent=0 // pred_region
    _
  $region25: #{tpu_custom_call.1} parent=0 // pred_fallthru
    _
  // Predicated region
  $region26: #{tpu_custom_call.1} parent=0 // pred_check
    _
  $region27: #{tpu_custom_call.1} parent=0 // pred_check_branch
    %25 = sbr.rel (0) target = $region29
  $region28: #{tpu_custom_call.1} parent=0 // pred_region
    _
  $region29: #{tpu_custom_call.1} parent=0 // pred_fallthru
    _
  %v27 = vld [vmem:[%s0] sm:$0xff]
  %v28 = vld [vmem:[%s0 + $0x8] sm:$0xff]
  %v29 = vld [vmem:[%s0 + $0x10] sm:$0xff]
  %v30 = vld [vmem:[%s0 + $0x18] sm:$0xff]
  %v31 = vld [vmem:[%s0 + $0x20] sm:$0xff]
  %v32 = vld [vmem:[%s0 + $0x28] sm:$0xff]
  %v33 = vld [vmem:[%s0 + $0x30] sm:$0xff]
  %v34 = vld [vmem:[%s0 + $0x38] sm:$0xff]
  %v35 = vld [vmem:[%s0 + $0x40] sm:$0xff]
  %v36 = vld [vmem:[%s0 + $0x48] sm:$0xff]
  %v37 = vld [vmem:[%s0 + $0x50] sm:$0xff]
  %v38 = vld [vmem:[%s0 + $0x58] sm:$0xff]
  %v39 = vld [vmem:[%s0 + $0x60] sm:$0xff]
  %v40 = vld [vmem:[%s0 + $0x68] sm:$0xff]
  %v41 = vld [vmem:[%s0 + $0x70] sm:$0xff]
  %v42 = vld [vmem:[%s0 + $0x78] sm:$0xff]
  %v43 = vld [vmem:[%s0 + $0x80] sm:$0xff]
  %v44 = vld [vmem:[%s0 + $0x88] sm:$0xff]
  %v45 = vld [vmem:[%s0 + $0x90] sm:$0xff]
  %v46 = vld [vmem:[%s0 + $0x98] sm:$0xff]
  %v47 = vld [vmem:[%s0 + $0xa0] sm:$0xff]
  %v48 = vld [vmem:[%s0 + $0xa8] sm:$0xff]
  %v49 = vld [vmem:[%s0 + $0xb0] sm:$0xff]
  %v50 = vld [vmem:[%s0 + $0xb8] sm:$0xff]
  %v51 = vld [vmem:[%s0 + $0xc0] sm:$0xff]
  %v52 = vld [vmem:[%s0 + $0xc8] sm:$0xff]
  %v53 = vld [vmem:[%s0 + $0xd0] sm:$0xff]
  %v54 = vld [vmem:[%s0 + $0xd8] sm:$0xff]
  %v55 = vld [vmem:[%s0 + $0xe0] sm:$0xff]
  %v56 = vld [vmem:[%s0 + $0xe8] sm:$0xff]
  %v57 = vld [vmem:[%s0 + $0xf0] sm:$0xff]
  %v58 = vld [vmem:[%s0 + $0xf8] sm:$0xff]
  %v59 = vmul.f32 %v27, %v27
  %v60 = vmul.f32 %v28, %v28
  %v61 = vmul.f32 %v29, %v29
  %v62 = vmul.f32 %v30, %v30
  %v63 = vmul.f32 %v31, %v31
  %v64 = vmul.f32 %v32, %v32
  %v65 = vmul.f32 %v33, %v33
  %v66 = vmul.f32 %v34, %v34
  %v67 = vmul.f32 %v35, %v35
  %v68 = vmul.f32 %v36, %v36
  %v69 = vmul.f32 %v37, %v37
  %v70 = vmul.f32 %v38, %v38
  %v71 = vmul.f32 %v39, %v39
  %v72 = vmul.f32 %v40, %v40
  %v73 = vmul.f32 %v41, %v41
  %v74 = vmul.f32 %v42, %v42
  %v75 = vmul.f32 %v43, %v43
  %v76 = vmul.f32 %v44, %v44
  %v77 = vmul.f32 %v45, %v45
  %v78 = vmul.f32 %v46, %v46
  %v79 = vmul.f32 %v47, %v47
  %v80 = vmul.f32 %v48, %v48
  %v81 = vmul.f32 %v49, %v49
  %v82 = vmul.f32 %v50, %v50
  %v83 = vmul.f32 %v51, %v51
  %v84 = vmul.f32 %v52, %v52
  %v85 = vmul.f32 %v53, %v53
  %v86 = vmul.f32 %v54, %v54
  %v87 = vmul.f32 %v55, %v55
  %v88 = vmul.f32 %v56, %v56
  %v89 = vmul.f32 %v57, %v57
  %v90 = vmul.f32 %v58, %v58
  %vm91 = vcmask 261120
  %v92 = vsel %vm91, %v59, 0.0
  %93 = vadd.xlane.f32.xlu0 %v92
  %v94 = vpop.xlane.xlu0 %93
  %v95 = vsel %vm91, %v60, 0.0
  %96 = vadd.xlane.f32.xlu0 %v95
  %v97 = vpop.xlane.xlu0 %96
  %v98 = vsel %vm91, %v61, 0.0
  %99 = vadd.xlane.f32.xlu0 %v98
  %v100 = vpop.xlane.xlu0 %99
  %v101 = vsel %vm91, %v62, 0.0
  %102 = vadd.xlane.f32.xlu0 %v101
  %v103 = vpop.xlane.xlu0 %102
  %v104 = vsel %vm91, %v63, 0.0
  %105 = vadd.xlane.f32.xlu0 %v104
  %v106 = vpop.xlane.xlu0 %105
  %v107 = vsel %vm91, %v64, 0.0
  %108 = vadd.xlane.f32.xlu0 %v107
  %v109 = vpop.xlane.xlu0 %108
  %v110 = vsel %vm91, %v65, 0.0
  %111 = vadd.xlane.f32.xlu0 %v110
  %v112 = vpop.xlane.xlu0 %111
  %v113 = vsel %vm91, %v66, 0.0
  %114 = vadd.xlane.f32.xlu0 %v113
  %v115 = vpop.xlane.xlu0 %114
  %v116 = vsel %vm91, %v67, 0.0
  %117 = vadd.xlane.f32.xlu0 %v116
  %v118 = vpop.xlane.xlu0 %117
  %v119 = vsel %vm91, %v68, 0.0
  %120 = vadd.xlane.f32.xlu0 %v119
  %v121 = vpop.xlane.xlu0 %120
  %v122 = vsel %vm91, %v69, 0.0
  %123 = vadd.xlane.f32.xlu0 %v122
  %v124 = vpop.xlane.xlu0 %123
  %v125 = vsel %vm91, %v70, 0.0
  %126 = vadd.xlane.f32.xlu0 %v125
  %v127 = vpop.xlane.xlu0 %126
  %v128 = vsel %vm91, %v71, 0.0
  %129 = vadd.xlane.f32.xlu0 %v128
  %v130 = vpop.xlane.xlu0 %129
  %v131 = vsel %vm91, %v72, 0.0
  %132 = vadd.xlane.f32.xlu0 %v131
  %v133 = vpop.xlane.xlu0 %132
  %v134 = vsel %vm91, %v73, 0.0
  %135 = vadd.xlane.f32.xlu0 %v134
  %v136 = vpop.xlane.xlu0 %135
  %v137 = vsel %vm91, %v74, 0.0
  %138 = vadd.xlane.f32.xlu0 %v137
  %v139 = vpop.xlane.xlu0 %138
  %v140 = vsel %vm91, %v75, 0.0
  %141 = vadd.xlane.f32.xlu0 %v140
  %v142 = vpop.xlane.xlu0 %141
  %v143 = vsel %vm91, %v76, 0.0
  %144 = vadd.xlane.f32.xlu0 %v143
  %v145 = vpop.xlane.xlu0 %144
  %v146 = vsel %vm91, %v77, 0.0
  %147 = vadd.xlane.f32.xlu0 %v146
  %v148 = vpop.xlane.xlu0 %147
  %v149 = vsel %vm91, %v78, 0.0
  %150 = vadd.xlane.f32.xlu0 %v149
  %v151 = vpop.xlane.xlu0 %150
  %v152 = vsel %vm91, %v79, 0.0
  %153 = vadd.xlane.f32.xlu0 %v152
  %v154 = vpop.xlane.xlu0 %153
  %v155 = vsel %vm91, %v80, 0.0
  %156 = vadd.xlane.f32.xlu0 %v155
  %v157 = vpop.xlane.xlu0 %156
  %v158 = vsel %vm91, %v81, 0.0
  %159 = vadd.xlane.f32.xlu0 %v158
  %v160 = vpop.xlane.xlu0 %159
  %v161 = vsel %vm91, %v82, 0.0
  %162 = vadd.xlane.f32.xlu0 %v161
  %v163 = vpop.xlane.xlu0 %162
  %v164 = vsel %vm91, %v83, 0.0
  %165 = vadd.xlane.f32.xlu0 %v164
  %v166 = vpop.xlane.xlu0 %165
  %v167 = vsel %vm91, %v84, 0.0
  %168 = vadd.xlane.f32.xlu0 %v167
  %v169 = vpop.xlane.xlu0 %168
  %v170 = vsel %vm91, %v85, 0.0
  %171 = vadd.xlane.f32.xlu0 %v170
  %v172 = vpop.xlane.xlu0 %171
  %v173 = vsel %vm91, %v86, 0.0
  %174 = vadd.xlane.f32.xlu0 %v173
  %v175 = vpop.xlane.xlu0 %174
  %v176 = vsel %vm91, %v87, 0.0
  %177 = vadd.xlane.f32.xlu0 %v176
  %v178 = vpop.xlane.xlu0 %177
  %v179 = vsel %vm91, %v88, 0.0
  %180 = vadd.xlane.f32.xlu0 %v179
  %v181 = vpop.xlane.xlu0 %180
  %v182 = vsel %vm91, %v89, 0.0
  %183 = vadd.xlane.f32.xlu0 %v182
  %v184 = vpop.xlane.xlu0 %183
  %v185 = vsel %vm91, %v90, 0.0
  %186 = vadd.xlane.f32.xlu0 %v185
  %v187 = vpop.xlane.xlu0 %186
  %v188 = vmul.f32 %v94, 0.03125
  %v189 = vmul.f32 %v97, 0.03125
  %v190 = vmul.f32 %v100, 0.03125
  %v191 = vmul.f32 %v103, 0.03125
  %v192 = vmul.f32 %v106, 0.03125
  %v193 = vmul.f32 %v109, 0.03125
  %v194 = vmul.f32 %v112, 0.03125
  %v195 = vmul.f32 %v115, 0.03125
  %v196 = vmul.f32 %v118, 0.03125
  %v197 = vmul.f32 %v121, 0.03125
  %v198 = vmul.f32 %v124, 0.03125
  %v199 = vmul.f32 %v127, 0.03125
  %v200 = vmul.f32 %v130, 0.03125
  %v201 = vmul.f32 %v133, 0.03125
  %v202 = vmul.f32 %v136, 0.03125
  %v203 = vmul.f32 %v139, 0.03125
  %v204 = vmul.f32 %v142, 0.03125
  %v205 = vmul.f32 %v145, 0.03125
  %v206 = vmul.f32 %v148, 0.03125
  %v207 = vmul.f32 %v151, 0.03125
  %v208 = vmul.f32 %v154, 0.03125
  %v209 = vmul.f32 %v157, 0.03125
  %v210 = vmul.f32 %v160, 0.03125
  %v211 = vmul.f32 %v163, 0.03125
  %v212 = vmul.f32 %v166, 0.03125
  %v213 = vmul.f32 %v169, 0.03125
  %v214 = vmul.f32 %v172, 0.03125
  %v215 = vmul.f32 %v175, 0.03125
  %v216 = vmul.f32 %v178, 0.03125
  %v217 = vmul.f32 %v181, 0.03125
  %v218 = vmul.f32 %v184, 0.03125
  %v219 = vmul.f32 %v187, 0.03125
  %v220 = vadd.f32 %v188, 1e-08
  %v221 = vadd.f32 %v189, 1e-08
  %v222 = vadd.f32 %v190, 1e-08
  %v223 = vadd.f32 %v191, 1e-08
  %v224 = vadd.f32 %v192, 1e-08
  %v225 = vadd.f32 %v193, 1e-08
  %v226 = vadd.f32 %v194, 1e-08
  %v227 = vadd.f32 %v195, 1e-08
  %v228 = vadd.f32 %v196, 1e-08
  %v229 = vadd.f32 %v197, 1e-08
  %v230 = vadd.f32 %v198, 1e-08
  %v231 = vadd.f32 %v199, 1e-08
  %v232 = vadd.f32 %v200, 1e-08
  %v233 = vadd.f32 %v201, 1e-08
  %v234 = vadd.f32 %v202, 1e-08
  %v235 = vadd.f32 %v203, 1e-08
  %v236 = vadd.f32 %v204, 1e-08
  %v237 = vadd.f32 %v205, 1e-08
  %v238 = vadd.f32 %v206, 1e-08
  %v239 = vadd.f32 %v207, 1e-08
  %v240 = vadd.f32 %v208, 1e-08
  %v241 = vadd.f32 %v209, 1e-08
  %v242 = vadd.f32 %v210, 1e-08
  %v243 = vadd.f32 %v211, 1e-08
  %v244 = vadd.f32 %v212, 1e-08
  %v245 = vadd.f32 %v213, 1e-08
  %v246 = vadd.f32 %v214, 1e-08
  %v247 = vadd.f32 %v215, 1e-08
  %v248 = vadd.f32 %v216, 1e-08
  %v249 = vadd.f32 %v217, 1e-08
  %v250 = vadd.f32 %v218, 1e-08
  %v251 = vadd.f32 %v219, 1e-08
  %v252 = vrsqrt.pop %v220
  %v253 = vrsqrt.pop %v221
  %v254 = vrsqrt.pop %v222
  %v255 = vrsqrt.pop %v223
  %v256 = vrsqrt.pop %v224
  %v257 = vrsqrt.pop %v225
  %v258 = vrsqrt.pop %v226
  %v259 = vrsqrt.pop %v227
  %v260 = vrsqrt.pop %v228
  %v261 = vrsqrt.pop %v229
  %v262 = vrsqrt.pop %v230
  %v263 = vrsqrt.pop %v231
  %v264 = vrsqrt.pop %v232
  %v265 = vrsqrt.pop %v233
  %v266 = vrsqrt.pop %v234
  %v267 = vrsqrt.pop %v235
  %v268 = vrsqrt.pop %v236
  %v269 = vrsqrt.pop %v237
  %v270 = vrsqrt.pop %v238
  %v271 = vrsqrt.pop %v239
  %v272 = vrsqrt.pop %v240
  %v273 = vrsqrt.pop %v241
  %v274 = vrsqrt.pop %v242
  %v275 = vrsqrt.pop %v243
  %v276 = vrsqrt.pop %v244
  %v277 = vrsqrt.pop %v245
  %v278 = vrsqrt.pop %v246
  %v279 = vrsqrt.pop %v247
  %v280 = vrsqrt.pop %v248
  %v281 = vrsqrt.pop %v249
  %v282 = vrsqrt.pop %v250
  %v283 = vrsqrt.pop %v251
  %v284 = vmul.f32 %v27, %v252
  %v285 = vmul.f32 %v28, %v253
  %v286 = vmul.f32 %v29, %v254
  %v287 = vmul.f32 %v30, %v255
  %v288 = vmul.f32 %v31, %v256
  %v289 = vmul.f32 %v32, %v257
  %v290 = vmul.f32 %v33, %v258
  %v291 = vmul.f32 %v34, %v259
  %v292 = vmul.f32 %v35, %v260
  %v293 = vmul.f32 %v36, %v261
  %v294 = vmul.f32 %v37, %v262
  %v295 = vmul.f32 %v38, %v263
  %v296 = vmul.f32 %v39, %v264
  %v297 = vmul.f32 %v40, %v265
  %v298 = vmul.f32 %v41, %v266
  %v299 = vmul.f32 %v42, %v267
  %v300 = vmul.f32 %v43, %v268
  %v301 = vmul.f32 %v44, %v269
  %v302 = vmul.f32 %v45, %v270
  %v303 = vmul.f32 %v46, %v271
  %v304 = vmul.f32 %v47, %v272
  %v305 = vmul.f32 %v48, %v273
  %v306 = vmul.f32 %v49, %v274
  %v307 = vmul.f32 %v50, %v275
  %v308 = vmul.f32 %v51, %v276
  %v309 = vmul.f32 %v52, %v277
  %v310 = vmul.f32 %v53, %v278
  %v311 = vmul.f32 %v54, %v279
  %v312 = vmul.f32 %v55, %v280
  %v313 = vmul.f32 %v56, %v281
  %v314 = vmul.f32 %v57, %v282
  %v315 = vmul.f32 %v58, %v283
  %v316 = vld [vmem:[%s1] sm:$0xf]
  %v317 = vld [vmem:[%s1 + $0x4] sm:$0xf]
  %v318 = vld [vmem:[%s1 + $0x8] sm:$0xf]
  %v319 = vld [vmem:[%s1 + $0xc] sm:$0xf]
  %v320 = vld [vmem:[%s2] sm:$0x1]
  %v321 = vpack.c.bf16 %v285, %v284
  %v322 = vpack.c.bf16 %v287, %v286
  %v323 = vpack.c.bf16 %v289, %v288
  %v324 = vpack.c.bf16 %v291, %v290
  %v325 = vpack.c.bf16 %v293, %v292
  %v326 = vpack.c.bf16 %v295, %v294
  %v327 = vpack.c.bf16 %v297, %v296
  %v328 = vpack.c.bf16 %v299, %v298
  %v329 = vpack.c.bf16 %v301, %v300
  %v330 = vpack.c.bf16 %v303, %v302
  %v331 = vpack.c.bf16 %v305, %v304
  %v332 = vpack.c.bf16 %v307, %v306
  %v333 = vpack.c.bf16 %v309, %v308
  %v334 = vpack.c.bf16 %v311, %v310
  %v335 = vpack.c.bf16 %v313, %v312
  %v336 = vpack.c.bf16 %v315, %v314
  %v338 = vlaneseq
  %v339 = vshrl.u32 %v338, 7
  %v340 = vsub.s32 0, %v339
  %v341 = vrot.slane %v320, %v340
  %v347 = vunpack.c.l.b16 %v316
  %v348 = vunpack.c.l.b16 %v317
  %v349 = vunpack.c.l.b16 %v318
  %v350 = vunpack.c.l.b16 %v319
  %v351 = vpack.c.b16 %v348, %v347
  %v352 = vpack.c.b16 %v350, %v349
  %v356 = vsel %vm91, %v321, 0
  %v359 = vsel %vm91, %v322, 0
  %v362 = vsel %vm91, %v323, 0
  %v365 = vsel %vm91, %v324, 0
  %v368 = vsel %vm91, %v325, 0
  %v371 = vsel %vm91, %v326, 0
  %v374 = vsel %vm91, %v327, 0
  %v377 = vsel %vm91, %v328, 0
  %v380 = vsel %vm91, %v329, 0
  %v383 = vsel %vm91, %v330, 0
  %v386 = vsel %vm91, %v331, 0
  %v389 = vsel %vm91, %v332, 0
  %v392 = vsel %vm91, %v333, 0
  %v395 = vsel %vm91, %v334, 0
  %v398 = vsel %vm91, %v335, 0
  %v401 = vsel %vm91, %v336, 0
  %403 = vmatprep.subr.bf16.mxu0 0
  %404 = vmatpush1.bf16.msra.mxu0 0
  %405 = vmatprep.subr.bf16.mxu0 0
  %406 = vmatpush1.bf16.msra.mxu0 0
  %407 = vmatprep.subr.bf16.mxu0 0
  %408 = vmatpush1.bf16.msra.mxu0 0
  %409 = vmatprep.subr.bf16.mxu0 0
  %410 = vmatpush1.bf16.msra.mxu0 0
  %411 = vmatprep.subr.bf16.mxu0 0
  %412 = vmatpush1.bf16.msra.mxu0 0
  %413 = vmatprep.subr.bf16.mxu0 0
  %414 = vmatpush1.bf16.msra.mxu0 0
  %415 = vmatprep.subr.bf16.mxu0 0
  %416 = vmatpush1.bf16.msra.mxu0 %v352
  %417 = vmatprep.subr.bf16.mxu0 0
  %418 = vmatpush1.bf16.msra.mxu0 %v351
  %419 = vmatprep.subr.bf16.mxu0 0
  %420 = vmatpush2.bf16.msra.mxu0 0
  %421 = vmatprep.subr.bf16.mxu0 0
  %422 = vmatpush2.bf16.msra.mxu0 0
  %423 = vmatprep.subr.bf16.mxu0 0
  %424 = vmatpush2.bf16.msra.mxu0 0
  %425 = vmatprep.subr.bf16.mxu0 0
  %426 = vmatpush2.bf16.msra.mxu0 0
  %427 = vmatprep.subr.bf16.mxu0 0
  %428 = vmatpush2.bf16.msra.mxu0 0
  %429 = vmatprep.subr.bf16.mxu0 0
  %430 = vmatpush2.bf16.msra.mxu0 0
  %431 = vmatprep.subr.bf16.mxu0 0
  %432 = vmatpush2.bf16.msra.mxu0 0
  %433 = vmatprep.subr.bf16.mxu0 0
  %434 = vmatpush2.bf16.msra.mxu0 0
  %435 = vmatprep.mubr.bf16.mxu0 0
  %436 = vmatmul.mubr.bf16.gmra.mxu0 %v356
  %v437 = vpop.f32.mrf.mxu0
  %v438 = vadd.f32 %v341, %v437
  %v439 = vpop.f32.mrf.mxu0
  %v440 = vpop.f32.mrf.mxu0
  %v441 = vadd.f32 %v341, %v440
  %v442 = vpop.f32.mrf.mxu0
  %443 = vmatprep.mubr.bf16.mxu0 0
  %444 = vmatmul.mubr.bf16.gmra.mxu0 %v359
  %v445 = vpop.f32.mrf.mxu0
  %v446 = vadd.f32 %v341, %v445
  %v447 = vpop.f32.mrf.mxu0
  %v448 = vpop.f32.mrf.mxu0
  %v449 = vadd.f32 %v341, %v448
  %v450 = vpop.f32.mrf.mxu0
  %451 = vmatprep.mubr.bf16.mxu0 0
  %452 = vmatmul.mubr.bf16.gmra.mxu0 %v362
  %v453 = vpop.f32.mrf.mxu0
  %v454 = vadd.f32 %v341, %v453
  %v455 = vpop.f32.mrf.mxu0
  %v456 = vpop.f32.mrf.mxu0
  %v457 = vadd.f32 %v341, %v456
  %v458 = vpop.f32.mrf.mxu0
  %459 = vmatprep.mubr.bf16.mxu0 0
  %460 = vmatmul.mubr.bf16.gmra.mxu0 %v365
  %v461 = vpop.f32.mrf.mxu0
  %v462 = vadd.f32 %v341, %v461
  %v463 = vpop.f32.mrf.mxu0
  %v464 = vpop.f32.mrf.mxu0
  %v465 = vadd.f32 %v341, %v464
  %v466 = vpop.f32.mrf.mxu0
  %467 = vmatprep.mubr.bf16.mxu0 0
  %468 = vmatmul.mubr.bf16.gmra.mxu0 %v368
  %v469 = vpop.f32.mrf.mxu0
  %v470 = vadd.f32 %v341, %v469
  %v471 = vpop.f32.mrf.mxu0
  %v472 = vpop.f32.mrf.mxu0
  %v473 = vadd.f32 %v341, %v472
  %v474 = vpop.f32.mrf.mxu0
  %475 = vmatprep.mubr.bf16.mxu0 0
  %476 = vmatmul.mubr.bf16.gmra.mxu0 %v371
  %v477 = vpop.f32.mrf.mxu0
  %v478 = vadd.f32 %v341, %v477
  %v479 = vpop.f32.mrf.mxu0
  %v480 = vpop.f32.mrf.mxu0
  %v481 = vadd.f32 %v341, %v480
  %v482 = vpop.f32.mrf.mxu0
  %483 = vmatprep.mubr.bf16.mxu0 0
  %484 = vmatmul.mubr.bf16.gmra.mxu0 %v374
  %v485 = vpop.f32.mrf.mxu0
  %v486 = vadd.f32 %v341, %v485
  %v487 = vpop.f32.mrf.mxu0
  %v488 = vpop.f32.mrf.mxu0
  %v489 = vadd.f32 %v341, %v488
  %v490 = vpop.f32.mrf.mxu0
  %491 = vmatprep.mubr.bf16.mxu0 0
  %492 = vmatmul.mubr.bf16.gmra.mxu0 %v377
  %v493 = vpop.f32.mrf.mxu0
  %v494 = vadd.f32 %v341, %v493
  %v495 = vpop.f32.mrf.mxu0
  %v496 = vpop.f32.mrf.mxu0
  %v497 = vadd.f32 %v341, %v496
  %v498 = vpop.f32.mrf.mxu0
  %499 = vmatprep.mubr.bf16.mxu0 0
  %500 = vmatmul.mubr.bf16.gmra.mxu0 %v380
  %v501 = vpop.f32.mrf.mxu0
  %v502 = vadd.f32 %v341, %v501
  %v503 = vpop.f32.mrf.mxu0
  %v504 = vpop.f32.mrf.mxu0
  %v505 = vadd.f32 %v341, %v504
  %v506 = vpop.f32.mrf.mxu0
  %507 = vmatprep.mubr.bf16.mxu0 0
  %508 = vmatmul.mubr.bf16.gmra.mxu0 %v383
  %v509 = vpop.f32.mrf.mxu0
  %v510 = vadd.f32 %v341, %v509
  %v511 = vpop.f32.mrf.mxu0
  %v512 = vpop.f32.mrf.mxu0
  %v513 = vadd.f32 %v341, %v512
  %v514 = vpop.f32.mrf.mxu0
  %515 = vmatprep.mubr.bf16.mxu0 0
  %516 = vmatmul.mubr.bf16.gmra.mxu0 %v386
  %v517 = vpop.f32.mrf.mxu0
  %v518 = vadd.f32 %v341, %v517
  %v519 = vpop.f32.mrf.mxu0
  %v520 = vpop.f32.mrf.mxu0
  %v521 = vadd.f32 %v341, %v520
  %v522 = vpop.f32.mrf.mxu0
  %523 = vmatprep.mubr.bf16.mxu0 0
  %524 = vmatmul.mubr.bf16.gmra.mxu0 %v389
  %v525 = vpop.f32.mrf.mxu0
  %v526 = vadd.f32 %v341, %v525
  %v527 = vpop.f32.mrf.mxu0
  %v528 = vpop.f32.mrf.mxu0
  %v529 = vadd.f32 %v341, %v528
  %v530 = vpop.f32.mrf.mxu0
  %531 = vmatprep.mubr.bf16.mxu0 0
  %532 = vmatmul.mubr.bf16.gmra.mxu0 %v392
  %v533 = vpop.f32.mrf.mxu0
  %v534 = vadd.f32 %v341, %v533
  %v535 = vpop.f32.mrf.mxu0
  %v536 = vpop.f32.mrf.mxu0
  %v537 = vadd.f32 %v341, %v536
  %v538 = vpop.f32.mrf.mxu0
  %539 = vmatprep.mubr.bf16.mxu0 0
  %540 = vmatmul.mubr.bf16.gmra.mxu0 %v395
  %v541 = vpop.f32.mrf.mxu0
  %v542 = vadd.f32 %v341, %v541
  %v543 = vpop.f32.mrf.mxu0
  %v544 = vpop.f32.mrf.mxu0
  %v545 = vadd.f32 %v341, %v544
  %v546 = vpop.f32.mrf.mxu0
  %547 = vmatprep.mubr.bf16.mxu0 0
  %548 = vmatmul.mubr.bf16.gmra.mxu0 %v398
  %v549 = vpop.f32.mrf.mxu0
  %v550 = vadd.f32 %v341, %v549
  %v551 = vpop.f32.mrf.mxu0
  %v552 = vpop.f32.mrf.mxu0
  %v553 = vadd.f32 %v341, %v552
  %v554 = vpop.f32.mrf.mxu0
  %555 = vmatprep.mubr.bf16.mxu0 0
  %556 = vmatmul.mubr.bf16.gmra.mxu0 %v401
  %v557 = vpop.f32.mrf.mxu0
  %v558 = vadd.f32 %v341, %v557
  %v559 = vpop.f32.mrf.mxu0
  %v560 = vpop.f32.mrf.mxu0
  %v561 = vadd.f32 %v341, %v560
  %v562 = vpop.f32.mrf.mxu0
  %563 = vdwg.mxu0
  %v564 = vmax.f32 %v438, 0.0
  %v565 = vmax.f32 %v441, 0.0
  %v566 = vmax.f32 %v446, 0.0
  %v567 = vmax.f32 %v449, 0.0
  %v568 = vmax.f32 %v454, 0.0
  %v569 = vmax.f32 %v457, 0.0
  %v570 = vmax.f32 %v462, 0.0
  %v571 = vmax.f32 %v465, 0.0
  %v572 = vmax.f32 %v470, 0.0
  %v573 = vmax.f32 %v473, 0.0
  %v574 = vmax.f32 %v478, 0.0
  %v575 = vmax.f32 %v481, 0.0
  %v576 = vmax.f32 %v486, 0.0
  %v577 = vmax.f32 %v489, 0.0
  %v578 = vmax.f32 %v494, 0.0
  %v579 = vmax.f32 %v497, 0.0
  %v580 = vmax.f32 %v502, 0.0
  %v581 = vmax.f32 %v505, 0.0
  %v582 = vmax.f32 %v510, 0.0
  %v583 = vmax.f32 %v513, 0.0
  %v584 = vmax.f32 %v518, 0.0
  %v585 = vmax.f32 %v521, 0.0
  %v586 = vmax.f32 %v526, 0.0
  %v587 = vmax.f32 %v529, 0.0
  %v588 = vmax.f32 %v534, 0.0
  %v589 = vmax.f32 %v537, 0.0
  %v590 = vmax.f32 %v542, 0.0
  %v591 = vmax.f32 %v545, 0.0
  %v592 = vmax.f32 %v550, 0.0
  %v593 = vmax.f32 %v553, 0.0
  %v594 = vmax.f32 %v558, 0.0
  %v595 = vmax.f32 %v561, 0.0
  %v596 = vld [vmem:[%s3] sm:$0xf]
  %v597 = vld [vmem:[%s3 + $0x4] sm:$0xf]
  %v598 = vld [vmem:[%s3 + $0x8] sm:$0xf]
  %v599 = vld [vmem:[%s3 + $0xc] sm:$0xf]
  %v600 = vld [vmem:[%s3 + $0x10] sm:$0xf]
  %v601 = vld [vmem:[%s3 + $0x14] sm:$0xf]
  %v602 = vld [vmem:[%s3 + $0x18] sm:$0xf]
  %v603 = vld [vmem:[%s3 + $0x1c] sm:$0xf]
  %v604 = vld [vmem:[%s3 + $0x20] sm:$0xf]
  %v605 = vld [vmem:[%s3 + $0x24] sm:$0xf]
  %v606 = vld [vmem:[%s3 + $0x28] sm:$0xf]
  %v607 = vld [vmem:[%s3 + $0x2c] sm:$0xf]
  %v608 = vld [vmem:[%s3 + $0x30] sm:$0xf]
  %v609 = vld [vmem:[%s3 + $0x34] sm:$0xf]
  %v610 = vld [vmem:[%s3 + $0x38] sm:$0xf]
  %v611 = vld [vmem:[%s3 + $0x3c] sm:$0xf]
  %v612 = vld [vmem:[%s4] sm:$0x1]
  %v613 = vpack.c.bf16 %v565, %v564
  %v614 = vpack.c.bf16 %v567, %v566
  %v615 = vpack.c.bf16 %v569, %v568
  %v616 = vpack.c.bf16 %v571, %v570
  %v617 = vpack.c.bf16 %v573, %v572
  %v618 = vpack.c.bf16 %v575, %v574
  %v619 = vpack.c.bf16 %v577, %v576
  %v620 = vpack.c.bf16 %v579, %v578
  %v621 = vpack.c.bf16 %v581, %v580
  %v622 = vpack.c.bf16 %v583, %v582
  %v623 = vpack.c.bf16 %v585, %v584
  %v624 = vpack.c.bf16 %v587, %v586
  %v625 = vpack.c.bf16 %v589, %v588
  %v626 = vpack.c.bf16 %v591, %v590
  %v627 = vpack.c.bf16 %v593, %v592
  %v628 = vpack.c.bf16 %v595, %v594
  %v630 = vlaneseq
  %v631 = vshrl.u32 %v630, 7
  %v632 = vsub.s32 0, %v631
  %v633 = vrot.slane %v612, %v632
  %v651 = vunpack.c.l.b16 %v596
  %v652 = vunpack.c.l.b16 %v597
  %v653 = vunpack.c.l.b16 %v598
  %v654 = vunpack.c.l.b16 %v599
  %v655 = vunpack.c.l.b16 %v600
  %v656 = vunpack.c.l.b16 %v601
  %v657 = vunpack.c.l.b16 %v602
  %v658 = vunpack.c.l.b16 %v603
  %v659 = vunpack.c.l.b16 %v604
  %v660 = vunpack.c.l.b16 %v605
  %v661 = vunpack.c.l.b16 %v606
  %v662 = vunpack.c.l.b16 %v607
  %v663 = vunpack.c.l.b16 %v608
  %v664 = vunpack.c.l.b16 %v609
  %v665 = vunpack.c.l.b16 %v610
  %v666 = vunpack.c.l.b16 %v611
  %v667 = vpack.c.b16 %v652, %v651
  %v668 = vpack.c.b16 %v654, %v653
  %v669 = vpack.c.b16 %v656, %v655
  %v670 = vpack.c.b16 %v658, %v657
  %v671 = vpack.c.b16 %v660, %v659
  %v672 = vpack.c.b16 %v662, %v661
  %v673 = vpack.c.b16 %v664, %v663
  %v674 = vpack.c.b16 %v666, %v665
  %683 = vmatprep.subr.bf16.mxu0 0
  %684 = vmatpush1.bf16.msra.mxu0 %v674
  %685 = vmatprep.subr.bf16.mxu0 0
  %686 = vmatpush1.bf16.msra.mxu0 %v673
  %687 = vmatprep.subr.bf16.mxu0 0
  %688 = vmatpush1.bf16.msra.mxu0 %v672
  %689 = vmatprep.subr.bf16.mxu0 0
  %690 = vmatpush1.bf16.msra.mxu0 %v671
  %691 = vmatprep.subr.bf16.mxu0 0
  %692 = vmatpush1.bf16.msra.mxu0 %v670
  %693 = vmatprep.subr.bf16.mxu0 0
  %694 = vmatpush1.bf16.msra.mxu0 %v669
  %695 = vmatprep.subr.bf16.mxu0 0
  %696 = vmatpush1.bf16.msra.mxu0 %v668
  %697 = vmatprep.subr.bf16.mxu0 0
  %698 = vmatpush1.bf16.msra.mxu0 %v667
  %699 = vmatprep.subr.bf16.mxu0 0
  %700 = vmatpush2.bf16.msra.mxu0 0
  %701 = vmatprep.subr.bf16.mxu0 0
  %702 = vmatpush2.bf16.msra.mxu0 0
  %703 = vmatprep.subr.bf16.mxu0 0
  %704 = vmatpush2.bf16.msra.mxu0 0
  %705 = vmatprep.subr.bf16.mxu0 0
  %706 = vmatpush2.bf16.msra.mxu0 0
  %707 = vmatprep.subr.bf16.mxu0 0
  %708 = vmatpush2.bf16.msra.mxu0 0
  %709 = vmatprep.subr.bf16.mxu0 0
  %710 = vmatpush2.bf16.msra.mxu0 0
  %711 = vmatprep.subr.bf16.mxu0 0
  %712 = vmatpush2.bf16.msra.mxu0 0
  %713 = vmatprep.subr.bf16.mxu0 0
  %714 = vmatpush2.bf16.msra.mxu0 0
  %715 = vmatprep.mubr.bf16.mxu0 0
  %716 = vmatmul.mubr.bf16.gmra.mxu0 %v613
  %v717 = vpop.f32.mrf.mxu0
  %v718 = vadd.f32 %v633, %v717
  %v719 = vpop.f32.mrf.mxu0
  %v720 = vpop.f32.mrf.mxu0
  %v721 = vadd.f32 %v633, %v720
  %v722 = vpop.f32.mrf.mxu0
  %723 = vmatprep.mubr.bf16.mxu0 0
  %724 = vmatmul.mubr.bf16.gmra.mxu0 %v614
  %v725 = vpop.f32.mrf.mxu0
  %v726 = vadd.f32 %v633, %v725
  %v727 = vpop.f32.mrf.mxu0
  %v728 = vpop.f32.mrf.mxu0
  %v729 = vadd.f32 %v633, %v728
  %v730 = vpop.f32.mrf.mxu0
  %731 = vmatprep.mubr.bf16.mxu0 0
  %732 = vmatmul.mubr.bf16.gmra.mxu0 %v615
  %v733 = vpop.f32.mrf.mxu0
  %v734 = vadd.f32 %v633, %v733
  %v735 = vpop.f32.mrf.mxu0
  %v736 = vpop.f32.mrf.mxu0
  %v737 = vadd.f32 %v633, %v736
  %v738 = vpop.f32.mrf.mxu0
  %739 = vmatprep.mubr.bf16.mxu0 0
  %740 = vmatmul.mubr.bf16.gmra.mxu0 %v616
  %v741 = vpop.f32.mrf.mxu0
  %v742 = vadd.f32 %v633, %v741
  %v743 = vpop.f32.mrf.mxu0
  %v744 = vpop.f32.mrf.mxu0
  %v745 = vadd.f32 %v633, %v744
  %v746 = vpop.f32.mrf.mxu0
  %747 = vmatprep.mubr.bf16.mxu0 0
  %748 = vmatmul.mubr.bf16.gmra.mxu0 %v617
  %v749 = vpop.f32.mrf.mxu0
  %v750 = vadd.f32 %v633, %v749
  %v751 = vpop.f32.mrf.mxu0
  %v752 = vpop.f32.mrf.mxu0
  %v753 = vadd.f32 %v633, %v752
  %v754 = vpop.f32.mrf.mxu0
  %755 = vmatprep.mubr.bf16.mxu0 0
  %756 = vmatmul.mubr.bf16.gmra.mxu0 %v618
  %v757 = vpop.f32.mrf.mxu0
  %v758 = vadd.f32 %v633, %v757
  %v759 = vpop.f32.mrf.mxu0
  %v760 = vpop.f32.mrf.mxu0
  %v761 = vadd.f32 %v633, %v760
  %v762 = vpop.f32.mrf.mxu0
  %763 = vmatprep.mubr.bf16.mxu0 0
  %764 = vmatmul.mubr.bf16.gmra.mxu0 %v619
  %v765 = vpop.f32.mrf.mxu0
  %v766 = vadd.f32 %v633, %v765
  %v767 = vpop.f32.mrf.mxu0
  %v768 = vpop.f32.mrf.mxu0
  %v769 = vadd.f32 %v633, %v768
  %v770 = vpop.f32.mrf.mxu0
  %771 = vmatprep.mubr.bf16.mxu0 0
  %772 = vmatmul.mubr.bf16.gmra.mxu0 %v620
  %v773 = vpop.f32.mrf.mxu0
  %v774 = vadd.f32 %v633, %v773
  %v775 = vpop.f32.mrf.mxu0
  %v776 = vpop.f32.mrf.mxu0
  %v777 = vadd.f32 %v633, %v776
  %v778 = vpop.f32.mrf.mxu0
  %779 = vmatprep.mubr.bf16.mxu0 0
  %780 = vmatmul.mubr.bf16.gmra.mxu0 %v621
  %v781 = vpop.f32.mrf.mxu0
  %v782 = vadd.f32 %v633, %v781
  %v783 = vpop.f32.mrf.mxu0
  %v784 = vpop.f32.mrf.mxu0
  %v785 = vadd.f32 %v633, %v784
  %v786 = vpop.f32.mrf.mxu0
  %787 = vmatprep.mubr.bf16.mxu0 0
  %788 = vmatmul.mubr.bf16.gmra.mxu0 %v622
  %v789 = vpop.f32.mrf.mxu0
  %v790 = vadd.f32 %v633, %v789
  %v791 = vpop.f32.mrf.mxu0
  %v792 = vpop.f32.mrf.mxu0
  %v793 = vadd.f32 %v633, %v792
  %v794 = vpop.f32.mrf.mxu0
  %795 = vmatprep.mubr.bf16.mxu0 0
  %796 = vmatmul.mubr.bf16.gmra.mxu0 %v623
  %v797 = vpop.f32.mrf.mxu0
  %v798 = vadd.f32 %v633, %v797
  %v799 = vpop.f32.mrf.mxu0
  %v800 = vpop.f32.mrf.mxu0
  %v801 = vadd.f32 %v633, %v800
  %v802 = vpop.f32.mrf.mxu0
  %803 = vmatprep.mubr.bf16.mxu0 0
  %804 = vmatmul.mubr.bf16.gmra.mxu0 %v624
  %v805 = vpop.f32.mrf.mxu0
  %v806 = vadd.f32 %v633, %v805
  %v807 = vpop.f32.mrf.mxu0
  %v808 = vpop.f32.mrf.mxu0
  %v809 = vadd.f32 %v633, %v808
  %v810 = vpop.f32.mrf.mxu0
  %811 = vmatprep.mubr.bf16.mxu0 0
  %812 = vmatmul.mubr.bf16.gmra.mxu0 %v625
  %v813 = vpop.f32.mrf.mxu0
  %v814 = vadd.f32 %v633, %v813
  %v815 = vpop.f32.mrf.mxu0
  %v816 = vpop.f32.mrf.mxu0
  %v817 = vadd.f32 %v633, %v816
  %v818 = vpop.f32.mrf.mxu0
  %819 = vmatprep.mubr.bf16.mxu0 0
  %820 = vmatmul.mubr.bf16.gmra.mxu0 %v626
  %v821 = vpop.f32.mrf.mxu0
  %v822 = vadd.f32 %v633, %v821
  %v823 = vpop.f32.mrf.mxu0
  %v824 = vpop.f32.mrf.mxu0
  %v825 = vadd.f32 %v633, %v824
  %v826 = vpop.f32.mrf.mxu0
  %827 = vmatprep.mubr.bf16.mxu0 0
  %828 = vmatmul.mubr.bf16.gmra.mxu0 %v627
  %v829 = vpop.f32.mrf.mxu0
  %v830 = vadd.f32 %v633, %v829
  %v831 = vpop.f32.mrf.mxu0
  %v832 = vpop.f32.mrf.mxu0
  %v833 = vadd.f32 %v633, %v832
  %v834 = vpop.f32.mrf.mxu0
  %835 = vmatprep.mubr.bf16.mxu0 0
  %836 = vmatmul.mubr.bf16.gmra.mxu0 %v628
  %v837 = vpop.f32.mrf.mxu0
  %v838 = vadd.f32 %v633, %v837
  %v839 = vpop.f32.mrf.mxu0
  %v840 = vpop.f32.mrf.mxu0
  %v841 = vadd.f32 %v633, %v840
  %v842 = vpop.f32.mrf.mxu0
  %843 = vdwg.mxu0
  %v844 = vmax.f32 %v718, 0.0
  %v845 = vmax.f32 %v721, 0.0
  %v846 = vmax.f32 %v726, 0.0
  %v847 = vmax.f32 %v729, 0.0
  %v848 = vmax.f32 %v734, 0.0
  %v849 = vmax.f32 %v737, 0.0
  %v850 = vmax.f32 %v742, 0.0
  %v851 = vmax.f32 %v745, 0.0
  %v852 = vmax.f32 %v750, 0.0
  %v853 = vmax.f32 %v753, 0.0
  %v854 = vmax.f32 %v758, 0.0
  %v855 = vmax.f32 %v761, 0.0
  %v856 = vmax.f32 %v766, 0.0
  %v857 = vmax.f32 %v769, 0.0
  %v858 = vmax.f32 %v774, 0.0
  %v859 = vmax.f32 %v777, 0.0
  %v860 = vmax.f32 %v782, 0.0
  %v861 = vmax.f32 %v785, 0.0
  %v862 = vmax.f32 %v790, 0.0
  %v863 = vmax.f32 %v793, 0.0
  %v864 = vmax.f32 %v798, 0.0
  %v865 = vmax.f32 %v801, 0.0
  %v866 = vmax.f32 %v806, 0.0
  %v867 = vmax.f32 %v809, 0.0
  %v868 = vmax.f32 %v814, 0.0
  %v869 = vmax.f32 %v817, 0.0
  %v870 = vmax.f32 %v822, 0.0
  %v871 = vmax.f32 %v825, 0.0
  %v872 = vmax.f32 %v830, 0.0
  %v873 = vmax.f32 %v833, 0.0
  %v874 = vmax.f32 %v838, 0.0
  %v875 = vmax.f32 %v841, 0.0
  %v876 = vld [vmem:[%s5] sm:$0xf]
  %v877 = vld [vmem:[%s5 + $0x4] sm:$0xf]
  %v878 = vld [vmem:[%s5 + $0x8] sm:$0xf]
  %v879 = vld [vmem:[%s5 + $0xc] sm:$0xf]
  %v880 = vld [vmem:[%s5 + $0x10] sm:$0xf]
  %v881 = vld [vmem:[%s5 + $0x14] sm:$0xf]
  %v882 = vld [vmem:[%s5 + $0x18] sm:$0xf]
  %v883 = vld [vmem:[%s5 + $0x1c] sm:$0xf]
  %v884 = vld [vmem:[%s5 + $0x20] sm:$0xf]
  %v885 = vld [vmem:[%s5 + $0x24] sm:$0xf]
  %v886 = vld [vmem:[%s5 + $0x28] sm:$0xf]
  %v887 = vld [vmem:[%s5 + $0x2c] sm:$0xf]
  %v888 = vld [vmem:[%s5 + $0x30] sm:$0xf]
  %v889 = vld [vmem:[%s5 + $0x34] sm:$0xf]
  %v890 = vld [vmem:[%s5 + $0x38] sm:$0xf]
  %v891 = vld [vmem:[%s5 + $0x3c] sm:$0xf]
  %v892 = vld [vmem:[%s6] sm:$0x1]
  %v893 = vpack.c.bf16 %v845, %v844
  %v894 = vpack.c.bf16 %v847, %v846
  %v895 = vpack.c.bf16 %v849, %v848
  %v896 = vpack.c.bf16 %v851, %v850
  %v897 = vpack.c.bf16 %v853, %v852
  %v898 = vpack.c.bf16 %v855, %v854
  %v899 = vpack.c.bf16 %v857, %v856
  %v900 = vpack.c.bf16 %v859, %v858
  %v901 = vpack.c.bf16 %v861, %v860
  %v902 = vpack.c.bf16 %v863, %v862
  %v903 = vpack.c.bf16 %v865, %v864
  %v904 = vpack.c.bf16 %v867, %v866
  %v905 = vpack.c.bf16 %v869, %v868
  %v906 = vpack.c.bf16 %v871, %v870
  %v907 = vpack.c.bf16 %v873, %v872
  %v908 = vpack.c.bf16 %v875, %v874
  %v910 = vlaneseq
  %v911 = vshrl.u32 %v910, 7
  %v912 = vsub.s32 0, %v911
  %v913 = vrot.slane %v892, %v912
  %v931 = vunpack.c.l.b16 %v876
  %v932 = vunpack.c.l.b16 %v877
  %v933 = vunpack.c.l.b16 %v878
  %v934 = vunpack.c.l.b16 %v879
  %v935 = vunpack.c.l.b16 %v880
  %v936 = vunpack.c.l.b16 %v881
  %v937 = vunpack.c.l.b16 %v882
  %v938 = vunpack.c.l.b16 %v883
  %v939 = vunpack.c.l.b16 %v884
  %v940 = vunpack.c.l.b16 %v885
  %v941 = vunpack.c.l.b16 %v886
  %v942 = vunpack.c.l.b16 %v887
  %v943 = vunpack.c.l.b16 %v888
  %v944 = vunpack.c.l.b16 %v889
  %v945 = vunpack.c.l.b16 %v890
  %v946 = vunpack.c.l.b16 %v891
  %v947 = vpack.c.b16 %v932, %v931
  %v948 = vpack.c.b16 %v934, %v933
  %v949 = vpack.c.b16 %v936, %v935
  %v950 = vpack.c.b16 %v938, %v937
  %v951 = vpack.c.b16 %v940, %v939
  %v952 = vpack.c.b16 %v942, %v941
  %v953 = vpack.c.b16 %v944, %v943
  %v954 = vpack.c.b16 %v946, %v945
  %963 = vmatprep.subr.bf16.mxu0 0
  %964 = vmatpush1.bf16.msra.mxu0 %v954
  %965 = vmatprep.subr.bf16.mxu0 0
  %966 = vmatpush1.bf16.msra.mxu0 %v953
  %967 = vmatprep.subr.bf16.mxu0 0
  %968 = vmatpush1.bf16.msra.mxu0 %v952
  %969 = vmatprep.subr.bf16.mxu0 0
  %970 = vmatpush1.bf16.msra.mxu0 %v951
  %971 = vmatprep.subr.bf16.mxu0 0
  %972 = vmatpush1.bf16.msra.mxu0 %v950
  %973 = vmatprep.subr.bf16.mxu0 0
  %974 = vmatpush1.bf16.msra.mxu0 %v949
  %975 = vmatprep.subr.bf16.mxu0 0
  %976 = vmatpush1.bf16.msra.mxu0 %v948
  %977 = vmatprep.subr.bf16.mxu0 0
  %978 = vmatpush1.bf16.msra.mxu0 %v947
  %979 = vmatprep.subr.bf16.mxu0 0
  %980 = vmatpush2.bf16.msra.mxu0 0
  %981 = vmatprep.subr.bf16.mxu0 0
  %982 = vmatpush2.bf16.msra.mxu0 0
  %983 = vmatprep.subr.bf16.mxu0 0
  %984 = vmatpush2.bf16.msra.mxu0 0
  %985 = vmatprep.subr.bf16.mxu0 0
  %986 = vmatpush2.bf16.msra.mxu0 0
  %987 = vmatprep.subr.bf16.mxu0 0
  %988 = vmatpush2.bf16.msra.mxu0 0
  %989 = vmatprep.subr.bf16.mxu0 0
  %990 = vmatpush2.bf16.msra.mxu0 0
  %991 = vmatprep.subr.bf16.mxu0 0
  %992 = vmatpush2.bf16.msra.mxu0 0
  %993 = vmatprep.subr.bf16.mxu0 0
  %994 = vmatpush2.bf16.msra.mxu0 0
  %995 = vmatprep.mubr.bf16.mxu0 0
  %996 = vmatmul.mubr.bf16.gmra.mxu0 %v893
  %v997 = vpop.f32.mrf.mxu0
  %v998 = vadd.f32 %v913, %v997
  %v999 = vpop.f32.mrf.mxu0
  %v1000 = vpop.f32.mrf.mxu0
  %v1001 = vadd.f32 %v913, %v1000
  %v1002 = vpop.f32.mrf.mxu0
  %1003 = vmatprep.mubr.bf16.mxu0 0
  %1004 = vmatmul.mubr.bf16.gmra.mxu0 %v894
  %v1005 = vpop.f32.mrf.mxu0
  %v1006 = vadd.f32 %v913, %v1005
  %v1007 = vpop.f32.mrf.mxu0
  %v1008 = vpop.f32.mrf.mxu0
  %v1009 = vadd.f32 %v913, %v1008
  %v1010 = vpop.f32.mrf.mxu0
  %1011 = vmatprep.mubr.bf16.mxu0 0
  %1012 = vmatmul.mubr.bf16.gmra.mxu0 %v895
  %v1013 = vpop.f32.mrf.mxu0
  %v1014 = vadd.f32 %v913, %v1013
  %v1015 = vpop.f32.mrf.mxu0
  %v1016 = vpop.f32.mrf.mxu0
  %v1017 = vadd.f32 %v913, %v1016
  %v1018 = vpop.f32.mrf.mxu0
  %1019 = vmatprep.mubr.bf16.mxu0 0
  %1020 = vmatmul.mubr.bf16.gmra.mxu0 %v896
  %v1021 = vpop.f32.mrf.mxu0
  %v1022 = vadd.f32 %v913, %v1021
  %v1023 = vpop.f32.mrf.mxu0
  %v1024 = vpop.f32.mrf.mxu0
  %v1025 = vadd.f32 %v913, %v1024
  %v1026 = vpop.f32.mrf.mxu0
  %1027 = vmatprep.mubr.bf16.mxu0 0
  %1028 = vmatmul.mubr.bf16.gmra.mxu0 %v897
  %v1029 = vpop.f32.mrf.mxu0
  %v1030 = vadd.f32 %v913, %v1029
  %v1031 = vpop.f32.mrf.mxu0
  %v1032 = vpop.f32.mrf.mxu0
  %v1033 = vadd.f32 %v913, %v1032
  %v1034 = vpop.f32.mrf.mxu0
  %1035 = vmatprep.mubr.bf16.mxu0 0
  %1036 = vmatmul.mubr.bf16.gmra.mxu0 %v898
  %v1037 = vpop.f32.mrf.mxu0
  %v1038 = vadd.f32 %v913, %v1037
  %v1039 = vpop.f32.mrf.mxu0
  %v1040 = vpop.f32.mrf.mxu0
  %v1041 = vadd.f32 %v913, %v1040
  %v1042 = vpop.f32.mrf.mxu0
  %1043 = vmatprep.mubr.bf16.mxu0 0
  %1044 = vmatmul.mubr.bf16.gmra.mxu0 %v899
  %v1045 = vpop.f32.mrf.mxu0
  %v1046 = vadd.f32 %v913, %v1045
  %v1047 = vpop.f32.mrf.mxu0
  %v1048 = vpop.f32.mrf.mxu0
  %v1049 = vadd.f32 %v913, %v1048
  %v1050 = vpop.f32.mrf.mxu0
  %1051 = vmatprep.mubr.bf16.mxu0 0
  %1052 = vmatmul.mubr.bf16.gmra.mxu0 %v900
  %v1053 = vpop.f32.mrf.mxu0
  %v1054 = vadd.f32 %v913, %v1053
  %v1055 = vpop.f32.mrf.mxu0
  %v1056 = vpop.f32.mrf.mxu0
  %v1057 = vadd.f32 %v913, %v1056
  %v1058 = vpop.f32.mrf.mxu0
  %1059 = vmatprep.mubr.bf16.mxu0 0
  %1060 = vmatmul.mubr.bf16.gmra.mxu0 %v901
  %v1061 = vpop.f32.mrf.mxu0
  %v1062 = vadd.f32 %v913, %v1061
  %v1063 = vpop.f32.mrf.mxu0
  %v1064 = vpop.f32.mrf.mxu0
  %v1065 = vadd.f32 %v913, %v1064
  %v1066 = vpop.f32.mrf.mxu0
  %1067 = vmatprep.mubr.bf16.mxu0 0
  %1068 = vmatmul.mubr.bf16.gmra.mxu0 %v902
  %v1069 = vpop.f32.mrf.mxu0
  %v1070 = vadd.f32 %v913, %v1069
  %v1071 = vpop.f32.mrf.mxu0
  %v1072 = vpop.f32.mrf.mxu0
  %v1073 = vadd.f32 %v913, %v1072
  %v1074 = vpop.f32.mrf.mxu0
  %1075 = vmatprep.mubr.bf16.mxu0 0
  %1076 = vmatmul.mubr.bf16.gmra.mxu0 %v903
  %v1077 = vpop.f32.mrf.mxu0
  %v1078 = vadd.f32 %v913, %v1077
  %v1079 = vpop.f32.mrf.mxu0
  %v1080 = vpop.f32.mrf.mxu0
  %v1081 = vadd.f32 %v913, %v1080
  %v1082 = vpop.f32.mrf.mxu0
  %1083 = vmatprep.mubr.bf16.mxu0 0
  %1084 = vmatmul.mubr.bf16.gmra.mxu0 %v904
  %v1085 = vpop.f32.mrf.mxu0
  %v1086 = vadd.f32 %v913, %v1085
  %v1087 = vpop.f32.mrf.mxu0
  %v1088 = vpop.f32.mrf.mxu0
  %v1089 = vadd.f32 %v913, %v1088
  %v1090 = vpop.f32.mrf.mxu0
  %1091 = vmatprep.mubr.bf16.mxu0 0
  %1092 = vmatmul.mubr.bf16.gmra.mxu0 %v905
  %v1093 = vpop.f32.mrf.mxu0
  %v1094 = vadd.f32 %v913, %v1093
  %v1095 = vpop.f32.mrf.mxu0
  %v1096 = vpop.f32.mrf.mxu0
  %v1097 = vadd.f32 %v913, %v1096
  %v1098 = vpop.f32.mrf.mxu0
  %1099 = vmatprep.mubr.bf16.mxu0 0
  %1100 = vmatmul.mubr.bf16.gmra.mxu0 %v906
  %v1101 = vpop.f32.mrf.mxu0
  %v1102 = vadd.f32 %v913, %v1101
  %v1103 = vpop.f32.mrf.mxu0
  %v1104 = vpop.f32.mrf.mxu0
  %v1105 = vadd.f32 %v913, %v1104
  %v1106 = vpop.f32.mrf.mxu0
  %1107 = vmatprep.mubr.bf16.mxu0 0
  %1108 = vmatmul.mubr.bf16.gmra.mxu0 %v907
  %v1109 = vpop.f32.mrf.mxu0
  %v1110 = vadd.f32 %v913, %v1109
  %v1111 = vpop.f32.mrf.mxu0
  %v1112 = vpop.f32.mrf.mxu0
  %v1113 = vadd.f32 %v913, %v1112
  %v1114 = vpop.f32.mrf.mxu0
  %1115 = vmatprep.mubr.bf16.mxu0 0
  %1116 = vmatmul.mubr.bf16.gmra.mxu0 %v908
  %v1117 = vpop.f32.mrf.mxu0
  %v1118 = vadd.f32 %v913, %v1117
  %v1119 = vpop.f32.mrf.mxu0
  %v1120 = vpop.f32.mrf.mxu0
  %v1121 = vadd.f32 %v913, %v1120
  %v1122 = vpop.f32.mrf.mxu0
  %1123 = vdwg.mxu0
  %vm1124 = vcmask 130048
  %1125 = vst.msk [vmem:[%s7] sm:$0xff] %vm1124, %v998
  %1126 = vst.msk [vmem:[%s7 + $0x8] sm:$0xff] %vm1124, %v1001
  %1127 = vst.msk [vmem:[%s7 + $0x10] sm:$0xff] %vm1124, %v1006
  %1128 = vst.msk [vmem:[%s7 + $0x18] sm:$0xff] %vm1124, %v1009
  %1129 = vst.msk [vmem:[%s7 + $0x20] sm:$0xff] %vm1124, %v1014
  %1130 = vst.msk [vmem:[%s7 + $0x28] sm:$0xff] %vm1124, %v1017
  %1131 = vst.msk [vmem:[%s7 + $0x30] sm:$0xff] %vm1124, %v1022
  %1132 = vst.msk [vmem:[%s7 + $0x38] sm:$0xff] %vm1124, %v1025
  %1133 = vst.msk [vmem:[%s7 + $0x40] sm:$0xff] %vm1124, %v1030
  %1134 = vst.msk [vmem:[%s7 + $0x48] sm:$0xff] %vm1124, %v1033
  %1135 = vst.msk [vmem:[%s7 + $0x50] sm:$0xff] %vm1124, %v1038
  %1136 = vst.msk [vmem:[%s7 + $0x58] sm:$0xff] %vm1124, %v1041
  %1137 = vst.msk [vmem:[%s7 + $0x60] sm:$0xff] %vm1124, %v1046
  %1138 = vst.msk [vmem:[%s7 + $0x68] sm:$0xff] %vm1124, %v1049
  %1139 = vst.msk [vmem:[%s7 + $0x70] sm:$0xff] %vm1124, %v1054
  %1140 = vst.msk [vmem:[%s7 + $0x78] sm:$0xff] %vm1124, %v1057
  %1141 = vst.msk [vmem:[%s7 + $0x80] sm:$0xff] %vm1124, %v1062
  %1142 = vst.msk [vmem:[%s7 + $0x88] sm:$0xff] %vm1124, %v1065
  %1143 = vst.msk [vmem:[%s7 + $0x90] sm:$0xff] %vm1124, %v1070
  %1144 = vst.msk [vmem:[%s7 + $0x98] sm:$0xff] %vm1124, %v1073
  %1145 = vst.msk [vmem:[%s7 + $0xa0] sm:$0xff] %vm1124, %v1078
  %1146 = vst.msk [vmem:[%s7 + $0xa8] sm:$0xff] %vm1124, %v1081
  %1147 = vst.msk [vmem:[%s7 + $0xb0] sm:$0xff] %vm1124, %v1086
  %1148 = vst.msk [vmem:[%s7 + $0xb8] sm:$0xff] %vm1124, %v1089
  %1149 = vst.msk [vmem:[%s7 + $0xc0] sm:$0xff] %vm1124, %v1094
  %1150 = vst.msk [vmem:[%s7 + $0xc8] sm:$0xff] %vm1124, %v1097
  %1151 = vst.msk [vmem:[%s7 + $0xd0] sm:$0xff] %vm1124, %v1102
  %1152 = vst.msk [vmem:[%s7 + $0xd8] sm:$0xff] %vm1124, %v1105
  %1153 = vst.msk [vmem:[%s7 + $0xe0] sm:$0xff] %vm1124, %v1110
  %1154 = vst.msk [vmem:[%s7 + $0xe8] sm:$0xff] %vm1124, %v1113
  %1155 = vst.msk [vmem:[%s7 + $0xf0] sm:$0xff] %vm1124, %v1118
  %1156 = vst.msk [vmem:[%s7 + $0xf8] sm:$0xff] %vm1124, %v1121
  // Predicated region
  $region30: #{tpu_custom_call.1} parent=0 // pred_check
    _
  $region31: #{tpu_custom_call.1} parent=0 // pred_check_branch
    %1158 = sbr.rel (0) target = $region33
  $region32: #{tpu_custom_call.1} parent=0 // pred_region
    _
  $region33: #{tpu_custom_call.1} parent=0 // pred_fallthru
    _
  // Predicated region
  $region34: #{tpu_custom_call.1} parent=0 // pred_check
    _
  $region35: #{tpu_custom_call.1} parent=0 // pred_check_branch
    %1160 = sbr.rel (0) target = $region37
  $region36: #{tpu_custom_call.1} parent=0 // pred_region
    _
  $region37: #{tpu_custom_call.1} parent=0 // pred_fallthru
    _

</llo_original>
